<compile_context>
chip_gen: v7x
topology: tpu7x:2x2x1
jax: 0.10.0
libtpu: 0.0.40
codegen_flags: <defaults>
</compile_context>

<pallas_src>
import jax
import jax.numpy as jnp
from jax.experimental import pallas as pl
from jax.experimental.pallas import tpu as pltpu


def _round_up(x, m):
    return ((x + m - 1) // m) * m


# ----------------------------------------------------------------------------
# Kernel 1: single LSTM step (one MXU-friendly fused gate matmul pair).
# ----------------------------------------------------------------------------
def _lstm_step_kernel(emb_ref, h0_ref, c0_ref, wih_ref, whh_ref, bg_ref,
                      hout_ref, cout_ref, relu_ref):
    Hp = cout_ref.shape[-1]
    x = emb_ref[...].astype(jnp.bfloat16)
    h = h0_ref[...].astype(jnp.bfloat16)
    gates = (
        jnp.dot(x, wih_ref[...], preferred_element_type=jnp.float32)
        + jnp.dot(h, whh_ref[...], preferred_element_type=jnp.float32)
        + bg_ref[...]
    )                                                  # (Bp, 4Hp); gate order i,f,g,o
    i = jax.nn.sigmoid(gates[:, 0 * Hp:1 * Hp])
    f = jax.nn.sigmoid(gates[:, 1 * Hp:2 * Hp])
    g = jnp.tanh(gates[:, 2 * Hp:3 * Hp])
    o = jax.nn.sigmoid(gates[:, 3 * Hp:4 * Hp])
    c_new = f * c0_ref[...] + i * g
    h_new = o * jnp.tanh(c_new)
    cout_ref[...] = c_new
    hout_ref[...] = h_new
    relu_ref[...] = jnp.maximum(h_new, 0.0).astype(relu_ref.dtype)   # bf16 for fc


# ----------------------------------------------------------------------------
# Kernel 2: vocab projection, tiled (and parallelisable) over the vocab axis.
# ----------------------------------------------------------------------------
def _vocab_proj_kernel(relu_ref, fcw_ref, fcb_ref, preds_ref):
    tn = preds_ref.shape[-1]
    off = pl.multiple_of(pl.program_id(0) * tn, 128)
    bias = fcb_ref[:, pl.ds(off, tn)]                  # full bias resident; VMEM slice
    preds_ref[...] = (
        jnp.dot(relu_ref[...], fcw_ref[...], preferred_element_type=jnp.float32)
        + bias
    )


def init_params(key, voc_len, embedding_size, hidden_size):
    """All parameters ~ N(0, 1), matching nn.init.normal_ in the reference."""
    H, E, V = hidden_size, embedding_size, voc_len
    ks = jax.random.split(key, 7)
    n = jax.random.normal
    return {
        "embedding": n(ks[0], (V, E), jnp.float32),
        "w_ih": n(ks[1], (4 * H, E), jnp.float32),   # LSTM input weights (i,f,g,o)
        "w_hh": n(ks[2], (4 * H, H), jnp.float32),
        "b_ih": n(ks[3], (4 * H,), jnp.float32),
        "b_hh": n(ks[4], (4 * H,), jnp.float32),
        "fc_w": n(ks[5], (V, H), jnp.float32),       # fc_1: Linear(H -> V)
        "fc_b": n(ks[6], (V,), jnp.float32),
    }


def make_decoder_fn(params, fc_tile=2048):
    """One-time weight prep (fuse / transpose / pad / bf16-cast), then a jitted
    per-step fn:  (word (B,) int32, prev_h (1,B,H), prev_c (1,B,H))
                  -> (pred (B,V), h_new (1,B,H), c_new (1,B,H))
    """
    emb_tbl = params["embedding"]                    # (V, E)
    w_ih, w_hh = params["w_ih"], params["w_hh"]      # (4H, E), (4H, H)
    b_gate = params["b_ih"] + params["b_hh"]         # (4H,)
    fc_w, fc_b = params["fc_w"], params["fc_b"]      # (V, H), (V,)

    V, E = emb_tbl.shape
    H = w_hh.shape[1]
    Ep, Hp = _round_up(E, 128), _round_up(H, 128)
    Vp = _round_up(V, 128)

    # Lane-dense vocab tile; keep the multi-buffered bf16 weight stream well
    # inside scoped VMEM for large H, then pad Vp so the tile divides it.
    TN = min(Vp, max(128, _round_up(fc_tile, 128)))
    while TN > 256 and 3 * Hp * TN * 2 > (24 << 20):
        TN //= 2
    Vp = _round_up(Vp, TN)
    num_tiles = Vp // TN
    fcw_buffers = 3 if num_tiles >= 3 else 2

    # Embedding table padded once so gathered rows are already lane-aligned.
    emb_p = jnp.pad(emb_tbl, ((0, 0), (0, Ep - E)))

    # Padded, pre-transposed LSTM gate weights (bf16).  Each gate occupies its
    # own 128-aligned column block.  Zero padding is safe: padded gate columns
    # stay 0 -> i,f,o = 0.5, g = 0, and padded c0 lanes are 0, so the padded
    # lanes of c_new / h_new remain exactly 0.
    wih = jnp.zeros((Ep, 4 * Hp), jnp.float32)
    whh = jnp.zeros((Hp, 4 * Hp), jnp.float32)
    bg = jnp.zeros((1, 4 * Hp), jnp.float32)
    w_ih_t, w_hh_t = w_ih.T, w_hh.T
    for gi in range(4):
        wih = wih.at[:E, gi * Hp:gi * Hp + H].set(w_ih_t[:, gi * H:(gi + 1) * H])
        whh = whh.at[:H, gi * Hp:gi * Hp + H].set(w_hh_t[:, gi * H:(gi + 1) * H])
        bg = bg.at[:, gi * Hp:gi * Hp + H].set(b_gate[gi * H:(gi + 1) * H][None, :])
    wih = wih.astype(jnp.bfloat16)
    whh = whh.astype(jnp.bfloat16)

    # fc_1 weight pre-transposed, padded, bf16; bias padded f32 (kept resident).
    # TODO(synk): on v5e/v6e store fcw per-channel int8 (fp8 on v7x) for 2x more.
    fcw = jnp.zeros((Hp, Vp), jnp.float32).at[:H, :V].set(fc_w.T).astype(jnp.bfloat16)
    fcb = jnp.zeros((1, Vp), jnp.float32).at[:, :V].set(fc_b[None, :])

    try:
        phys_vmem = int(pltpu.get_tpu_info().vmem_capacity_bytes)
    except Exception:
        phys_vmem = 64 * 1024 * 1024
    vmem_cap = phys_vmem * 3 // 4          # 96 MiB on v5e/v6e, 48 MiB on v7x

    def _limit(est_bytes):
        return int(min(max(2 * est_bytes, 16 * 1024 * 1024), vmem_cap))

    def forward(word, prev_h, prev_c):
        B = word.shape[0]
        Bp = _round_up(B, 8)               # full f32 sublane -> unmasked stores

        # TODO(synk): the embedding gather / state padding stay in JAX; an
        # in-kernel gather would need scalar-prefetched token ids + manual DMA
        # from the HBM table.  For a decode loop, carry h/c in padded (Bp, Hp)
        # form between steps to drop the pad/slice below.
        word_p = jnp.pad(word, (0, Bp - B))
        emb = jnp.take(emb_p, word_p, axis=0)                    # (Bp, Ep)
        h0 = jnp.pad(prev_h[0], ((0, Bp - B), (0, Hp - H)))      # (Bp, Hp)
        c0 = jnp.pad(prev_c[0], ((0, Bp - B), (0, Hp - H)))      # (Bp, Hp)

        lstm_bytes = (
            Bp * Ep * 4 + 4 * Bp * Hp * 4 + Bp * Hp * 2
            + (Ep + Hp) * 4 * Hp * 2 + 4 * Hp * 4 + Bp * 4 * Hp * 4
        )
        h_new, c_new, relu_h = pl.pallas_call(
            _lstm_step_kernel,
            out_shape=(
                jax.ShapeDtypeStruct((Bp, Hp), jnp.float32),     # h_new
                jax.ShapeDtypeStruct((Bp, Hp), jnp.float32),     # c_new
                jax.ShapeDtypeStruct((Bp, Hp), jnp.bfloat16),    # ReLU(h_new)
            ),
            compiler_params=pltpu.CompilerParams(
                vmem_limit_bytes=_limit(lstm_bytes)),
            cost_estimate=pl.CostEstimate(
                flops=2 * Bp * (Ep + Hp) * 4 * Hp,
                transcendentals=5 * Bp * Hp,
                bytes_accessed=lstm_bytes),
        )(emb, h0, c0, wih, whh, bg)

        proj_bytes = (
            2 * Bp * Hp * 2 + fcw_buffers * Hp * TN * 2
            + 2 * Vp * 4 + 2 * Bp * TN * 4
        )
        preds_p = pl.pallas_call(
            _vocab_proj_kernel,
            out_shape=jax.ShapeDtypeStruct((Bp, Vp), jnp.float32),
            grid_spec=pltpu.PrefetchScalarGridSpec(
                num_scalar_prefetch=0,
                grid=(num_tiles,),
                in_specs=[
                    pl.BlockSpec((Bp, Hp), lambda j: (0, 0)),        # ReLU(h), resident
                    pl.BlockSpec((Hp, TN), lambda j: (0, j),         # fc weight stream
                                 pipeline_mode=pl.Buffered(fcw_buffers)),
                    pl.BlockSpec((1, Vp), lambda j: (0, 0)),         # full bias, resident
                ],
                out_specs=pl.BlockSpec((Bp, TN), lambda j: (0, j)),  # lane-dense logits
            ),
            compiler_params=pltpu.CompilerParams(
                dimension_semantics=("parallel",),
                vmem_limit_bytes=_limit(proj_bytes)),
            cost_estimate=pl.CostEstimate(
                flops=2 * Bp * Hp * Vp,
                transcendentals=0,
                bytes_accessed=Hp * Vp * 2 + Vp * 4 + Bp * Vp * 4 + Bp * Hp * 2),
        )(relu_h, fcw, fcb)

        return preds_p[:B, :V], h_new[None, :B, :H], c_new[None, :B, :H]

    return jax.jit(forward)


def reference_forward(params, word, prev_h, prev_c):
    """Pure-JAX f32 reference mirroring the PyTorch Decoder.forward exactly."""
    H = params["w_hh"].shape[1]
    emb = jnp.take(params["embedding"], word, axis=0)            # (B, E)
    gates = (emb @ params["w_ih"].T + prev_h[0] @ params["w_hh"].T
             + params["b_ih"] + params["b_hh"])                  # (B, 4H)
    i = jax.nn.sigmoid(gates[:, :H])
    f = jax.nn.sigmoid(gates[:, H:2 * H])
    g = jnp.tanh(gates[:, 2 * H:3 * H])
    o = jax.nn.sigmoid(gates[:, 3 * H:])
    c = f * prev_c[0] + i * g
    h = o * jnp.tanh(c)
    out = jax.nn.relu(h)
    pred = out @ params["fc_w"].T + params["fc_b"]               # (B, V)
    return pred, h[None], c[None]


if __name__ == "__main__":
    B, E, H, V = 2, 16, 32, 40    # batch, embedding, hidden, vocab
    key = jax.random.PRNGKey(0)
    kp, kw, kh, kc = jax.random.split(key, 4)

    params = init_params(kp, V, E, H)
    word = jax.random.randint(kw, (B,), 0, V, dtype=jnp.int32)
    prev_hidden = jax.random.normal(kh, (1, B, H), jnp.float32)
    prev_cell = jax.random.normal(kc, (1, B, H), jnp.float32)

    decoder_step = make_decoder_fn(params)     # weight prep hoisted, done once
    pred, h_new, c_new = decoder_step(word, prev_hidden, prev_cell)
    jax.block_until_ready(pred)

    ref_p, ref_h, ref_c = reference_forward(params, word, prev_hidden, prev_cell)

    assert pred.shape == (B, V)
    assert h_new.shape == (1, B, H) and c_new.shape == (1, B, H)
    # bf16 weights (f32 accumulate) vs an all-f32 reference -> looser tolerances.
    assert bool(jnp.allclose(pred, ref_p, atol=2e-1, rtol=2e-1))
    assert bool(jnp.allclose(h_new, ref_h, atol=5e-2, rtol=5e-2))
    assert bool(jnp.allclose(c_new, ref_c, atol=5e-2, rtol=5e-2))
    print("KERNEL_OK")
</pallas_src>

<mosaic_0001>
module attributes {stable_mosaic.version = 11 : i64} {
  func.func @_vocab_proj_kernel(%arg0: i32, %arg1: memref<8x128xbf16, #tpu.memory_space<vmem>>, %arg2: memref<128x128xbf16, #tpu.memory_space<vmem>>, %arg3: memref<1x128xf32, #tpu.memory_space<vmem>>, %arg4: memref<8x128xf32, #tpu.memory_space<vmem>>) attributes {dimension_semantics = [#tpu.dimension_semantics<parallel>], iteration_bounds = array<i64: 1>, scalar_prefetch = 0 : i64, scratch_operands = 0 : i64, tpu.core_type = #tpu.core_type<tc>, window_params = [{pipeline_mode = #tpu.pipeline_mode<synchronous>, transform_indices = @transform_0, window_bounds = array<i64: 8, 128>}, {pipeline_mode = #tpu.pipeline_mode<double_buffered>, transform_indices = @transform_1, window_bounds = array<i64: 128, 128>}, {pipeline_mode = #tpu.pipeline_mode<synchronous>, transform_indices = @transform_2, window_bounds = array<i64: 1, 128>}, {transform_indices = @transform_3, window_bounds = array<i64: 8, 128>}]} {
    %c128_i32 = arith.constant 128 : i32
    %0 = arith.muli %arg0, %c128_i32 : i32
    %1 = tpu.assume_multiple %0, 128 : i32
    %c0 = arith.constant 0 : index
    %2 = arith.index_cast %1 : i32 to index
    %3 = vector.load %arg3[%c0, %2] : memref<1x128xf32, #tpu.memory_space<vmem>>, vector<1x128xf32>
    %c0_0 = arith.constant 0 : index
    %c0_1 = arith.constant 0 : index
    %4 = vector.load %arg1[%c0_0, %c0_1] : memref<8x128xbf16, #tpu.memory_space<vmem>>, vector<8x128xbf16>
    %c0_2 = arith.constant 0 : index
    %c0_3 = arith.constant 0 : index
    %5 = vector.load %arg2[%c0_2, %c0_3] : memref<128x128xbf16, #tpu.memory_space<vmem>>, vector<128x128xbf16>
    %cst = arith.constant dense<0.000000e+00> : vector<8x128xf32>
    %6 = tpu.matmul %4, %5, %cst {dimension_numbers = #tpu.dot_dimension_numbers<[1], [0], [0], [1], [0, 0, 1, 1], [], []>} : vector<8x128xbf16>, vector<128x128xbf16>, vector<8x128xf32> -> vector<8x128xf32>
    %7 = vector.broadcast %3 : vector<1x128xf32> to vector<8x128xf32>
    %8 = arith.addf %6, %7 : vector<8x128xf32>
    %c0_4 = arith.constant 0 : index
    %c0_5 = arith.constant 0 : index
    %9 = vector.load %arg4[%c0_4, %c0_5] : memref<8x128xf32, #tpu.memory_space<vmem>>, vector<8x128xf32>
    tpu.vector_store %arg4[%c0_4, %c0_5], %8 {strides = array<i32>} : memref<8x128xf32, #tpu.memory_space<vmem>>, vector<8x128xf32>,
    return
  }
  func.func @transform_0(%arg0: i32) -> (i32, i32) {
    %c0_i32 = arith.constant 0 : i32
    %c0_i32_0 = arith.constant 0 : i32
    %c0_i32_1 = arith.constant 0 : i32
    return %c0_i32, %c0_i32_0 : i32, i32
  }
  func.func @transform_1(%arg0: i32) -> (i32, i32) {
    %c0_i32 = arith.constant 0 : i32
    %c0_i32_0 = arith.constant 0 : i32
    return %c0_i32, %arg0 : i32, i32
  }
  func.func @transform_2(%arg0: i32) -> (i32, i32) {
    %c0_i32 = arith.constant 0 : i32
    %c0_i32_0 = arith.constant 0 : i32
    %c0_i32_1 = arith.constant 0 : i32
    return %c0_i32, %c0_i32_0 : i32, i32
  }
  func.func @transform_3(%arg0: i32) -> (i32, i32) {
    %c0_i32 = arith.constant 0 : i32
    %c0_i32_0 = arith.constant 0 : i32
    return %c0_i32, %arg0 : i32, i32
  }
}

module attributes {stable_mosaic.version = 11 : i64} {
  func.func @_lstm_step_kernel(%arg0: memref<8x128xf32, #tpu.memory_space<vmem>>, %arg1: memref<8x128xf32, #tpu.memory_space<vmem>>, %arg2: memref<8x128xf32, #tpu.memory_space<vmem>>, %arg3: memref<128x512xbf16, #tpu.memory_space<vmem>>, %arg4: memref<128x512xbf16, #tpu.memory_space<vmem>>, %arg5: memref<1x512xf32, #tpu.memory_space<vmem>>, %arg6: memref<8x128xf32, #tpu.memory_space<vmem>>, %arg7: memref<8x128xf32, #tpu.memory_space<vmem>>, %arg8: memref<8x128xbf16, #tpu.memory_space<vmem>>) attributes {dimension_semantics = [], scalar_prefetch = 0 : i64, scratch_operands = 0 : i64, tpu.core_type = #tpu.core_type<tc>} {
    %c0 = arith.constant 0 : index
    %c0_0 = arith.constant 0 : index
    %0 = vector.load %arg0[%c0, %c0_0] : memref<8x128xf32, #tpu.memory_space<vmem>>, vector<8x128xf32>
    %1 = arith.truncf %0 : vector<8x128xf32> to vector<8x128xbf16>
    %c0_1 = arith.constant 0 : index
    %c0_2 = arith.constant 0 : index
    %2 = vector.load %arg1[%c0_1, %c0_2] : memref<8x128xf32, #tpu.memory_space<vmem>>, vector<8x128xf32>
    %3 = arith.truncf %2 : vector<8x128xf32> to vector<8x128xbf16>
    %c0_3 = arith.constant 0 : index
    %c0_4 = arith.constant 0 : index
    %4 = vector.load %arg3[%c0_3, %c0_4] : memref<128x512xbf16, #tpu.memory_space<vmem>>, vector<128x512xbf16>
    %cst = arith.constant dense<0.000000e+00> : vector<8x512xf32>
    %5 = tpu.matmul %1, %4, %cst {dimension_numbers = #tpu.dot_dimension_numbers<[1], [0], [0], [1], [0, 0, 1, 1], [], []>} : vector<8x128xbf16>, vector<128x512xbf16>, vector<8x512xf32> -> vector<8x512xf32>
    %c0_5 = arith.constant 0 : index
    %c0_6 = arith.constant 0 : index
    %6 = vector.load %arg4[%c0_5, %c0_6] : memref<128x512xbf16, #tpu.memory_space<vmem>>, vector<128x512xbf16>
    %cst_7 = arith.constant dense<0.000000e+00> : vector<8x512xf32>
    %7 = tpu.matmul %3, %6, %cst_7 {dimension_numbers = #tpu.dot_dimension_numbers<[1], [0], [0], [1], [0, 0, 1, 1], [], []>} : vector<8x128xbf16>, vector<128x512xbf16>, vector<8x512xf32> -> vector<8x512xf32>
    %8 = arith.addf %5, %7 : vector<8x512xf32>
    %c0_8 = arith.constant 0 : index
    %c0_9 = arith.constant 0 : index
    %9 = vector.load %arg5[%c0_8, %c0_9] : memref<1x512xf32, #tpu.memory_space<vmem>>, vector<1x512xf32>
    %10 = vector.broadcast %9 : vector<1x512xf32> to vector<8x512xf32>
    %11 = arith.addf %8, %10 : vector<8x512xf32>
    %12 = vector.extract_strided_slice %11 {offsets = [0, 0], sizes = [8, 128], strides = [1, 1]} : vector<8x512xf32> to vector<8x128xf32>
    %13 = arith.negf %12 : vector<8x128xf32>
    %14 = math.exp %13 : vector<8x128xf32>
    %cst_10 = arith.constant 1.000000e+00 : f32
    %15 = vector.broadcast %cst_10 : f32 to vector<8x128xf32>
    %16 = arith.addf %15, %14 : vector<8x128xf32>
    %17 = arith.divf %15, %16 : vector<8x128xf32>
    %18 = vector.extract_strided_slice %11 {offsets = [0, 128], sizes = [8, 128], strides = [1, 1]} : vector<8x512xf32> to vector<8x128xf32>
    %19 = arith.negf %18 : vector<8x128xf32>
    %20 = math.exp %19 : vector<8x128xf32>
    %cst_11 = arith.constant 1.000000e+00 : f32
    %21 = vector.broadcast %cst_11 : f32 to vector<8x128xf32>
    %22 = arith.addf %21, %20 : vector<8x128xf32>
    %23 = arith.divf %21, %22 : vector<8x128xf32>
    %24 = vector.extract_strided_slice %11 {offsets = [0, 256], sizes = [8, 128], strides = [1, 1]} : vector<8x512xf32> to vector<8x128xf32>
    %25 = math.tanh %24 : vector<8x128xf32>
    %26 = vector.extract_strided_slice %11 {offsets = [0, 384], sizes = [8, 128], strides = [1, 1]} : vector<8x512xf32> to vector<8x128xf32>
    %27 = arith.negf %26 : vector<8x128xf32>
    %28 = math.exp %27 : vector<8x128xf32>
    %cst_12 = arith.constant 1.000000e+00 : f32
    %29 = vector.broadcast %cst_12 : f32 to vector<8x128xf32>
    %30 = arith.addf %29, %28 : vector<8x128xf32>
    %31 = arith.divf %29, %30 : vector<8x128xf32>
    %c0_13 = arith.constant 0 : index
    %c0_14 = arith.constant 0 : index
    %32 = vector.load %arg2[%c0_13, %c0_14] : memref<8x128xf32, #tpu.memory_space<vmem>>, vector<8x128xf32>
    %33 = arith.mulf %23, %32 : vector<8x128xf32>
    %34 = arith.mulf %17, %25 : vector<8x128xf32>
    %35 = arith.addf %33, %34 : vector<8x128xf32>
    %36 = math.tanh %35 : vector<8x128xf32>
    %37 = arith.mulf %31, %36 : vector<8x128xf32>
    %c0_15 = arith.constant 0 : index
    %c0_16 = arith.constant 0 : index
    %38 = vector.load %arg7[%c0_15, %c0_16] : memref<8x128xf32, #tpu.memory_space<vmem>>, vector<8x128xf32>
    tpu.vector_store %arg7[%c0_15, %c0_16], %35 {strides = array<i32>} : memref<8x128xf32, #tpu.memory_space<vmem>>, vector<8x128xf32>,
    %c0_17 = arith.constant 0 : index
    %c0_18 = arith.constant 0 : index
    %39 = vector.load %arg6[%c0_17, %c0_18] : memref<8x128xf32, #tpu.memory_space<vmem>>, vector<8x128xf32>
    tpu.vector_store %arg6[%c0_17, %c0_18], %37 {strides = array<i32>} : memref<8x128xf32, #tpu.memory_space<vmem>>, vector<8x128xf32>,
    %cst_19 = arith.constant 0.000000e+00 : f32
    %40 = vector.broadcast %cst_19 : f32 to vector<8x128xf32>
    %41 = arith.maximumf %37, %40 : vector<8x128xf32>
    %42 = arith.truncf %41 : vector<8x128xf32> to vector<8x128xbf16>
    %c0_20 = arith.constant 0 : index
    %c0_21 = arith.constant 0 : index
    %43 = vector.load %arg8[%c0_20, %c0_21] : memref<8x128xbf16, #tpu.memory_space<vmem>>, vector<8x128xbf16>
    tpu.vector_store %arg8[%c0_20, %c0_21], %42 {strides = array<i32>} : memref<8x128xbf16, #tpu.memory_space<vmem>>, vector<8x128xbf16>,
    return
  }
}

</mosaic_0001>

<llo_original>
// kernel: forward.3
$region0: #{forward.3}
  #allocation0 [shape = 'u32[]', space=smem, size = 0x4, offset = 0x4, fixed_abs, tag = 'smem constant byte address 0x4 - core index']
  #allocation1 [shape = 'u32[144,128]{1,0:T(1,128)}', space=vmem, size = 0x12000, scoped, tag = 'internal scratch']
  %s0 = inlined_call_operand.vmem [shape: bf16[8,128], index: 0, kind: input, shape index: {}]
  %s1 = inlined_call_operand.vmem [shape: bf16[128,128], index: 1, kind: input, shape index: {}]
  %s2 = inlined_call_operand.vmem [shape: f32[1,128], index: 2, kind: input, shape index: {}]
  %s3 = inlined_call_operand.vmem [shape: f32[8,128], index: 3, kind: output, shape index: {}]
  %s4 = sld [smem:[#allocation0]]
  $region22: #{forward.3} parent=0
    _
  %s6 = ssub.s32 1, %s4
  %s7 = scalar_select 0, %s6, %s4
  // Predicated region
  $region2: #{forward.3} parent=0 // pred_check
    _
  $region3: #{forward.3} parent=0 // pred_check_branch
    %9 = sbr.rel (0) target = $region5
  $region4: #{forward.3} parent=0 // pred_region
    _
  $region5: #{forward.3} parent=0 // pred_fallthru
    _
  // Predicated region
  $region6: #{forward.3} parent=0 // pred_check
    _
  $region7: #{forward.3} parent=0 // pred_check_branch
    %11 = sbr.rel (0) target = $region9
  $region8: #{forward.3} parent=0 // pred_region
    _
  $region9: #{forward.3} parent=0 // pred_fallthru
    _
  // Predicated region
  $region10: #{forward.3} parent=0 // pred_check
    _
  $region11: #{forward.3} parent=0 // pred_check_branch
    %13 = sbr.rel (0) target = $region13
  $region12: #{forward.3} parent=0 // pred_region
    _
  $region13: #{forward.3} parent=0 // pred_fallthru
    _
  %s15 = smul.u32 0, 128
  %s16 = sshra.s32 %s15, 7
  %s17 = sand.u32 %s15, 127
  %s18 = scalar_lea.vmem %s2, %s16
  %v19 = vld [vmem:[%s18] sm:$0x1]
  %v20 = vld [vmem:[%s0] sm:$0xf]
  %v21 = vld [vmem:[%s1] sm:$0xf]
  %v22 = vld [vmem:[%s1 + $0x4] sm:$0xf]
  %v23 = vld [vmem:[%s1 + $0x8] sm:$0xf]
  %v24 = vld [vmem:[%s1 + $0xc] sm:$0xf]
  %v25 = vld [vmem:[%s1 + $0x10] sm:$0xf]
  %v26 = vld [vmem:[%s1 + $0x14] sm:$0xf]
  %v27 = vld [vmem:[%s1 + $0x18] sm:$0xf]
  %v28 = vld [vmem:[%s1 + $0x1c] sm:$0xf]
  %v29 = vld [vmem:[%s1 + $0x20] sm:$0xf]
  %v30 = vld [vmem:[%s1 + $0x24] sm:$0xf]
  %v31 = vld [vmem:[%s1 + $0x28] sm:$0xf]
  %v32 = vld [vmem:[%s1 + $0x2c] sm:$0xf]
  %v33 = vld [vmem:[%s1 + $0x30] sm:$0xf]
  %v34 = vld [vmem:[%s1 + $0x34] sm:$0xf]
  %v35 = vld [vmem:[%s1 + $0x38] sm:$0xf]
  %v36 = vld [vmem:[%s1 + $0x3c] sm:$0xf]
  %v38 = vlaneseq
  %v39 = vshrl.u32 %v38, 7
  %v40 = vsub.s32 0, %v39
  %v41 = vrot.slane %v19, %v40
  %v59 = vunpack.c.l.b16 %v21
  %v60 = vunpack.c.l.b16 %v22
  %v61 = vunpack.c.l.b16 %v23
  %v62 = vunpack.c.l.b16 %v24
  %v63 = vunpack.c.l.b16 %v25
  %v64 = vunpack.c.l.b16 %v26
  %v65 = vunpack.c.l.b16 %v27
  %v66 = vunpack.c.l.b16 %v28
  %v67 = vunpack.c.l.b16 %v29
  %v68 = vunpack.c.l.b16 %v30
  %v69 = vunpack.c.l.b16 %v31
  %v70 = vunpack.c.l.b16 %v32
  %v71 = vunpack.c.l.b16 %v33
  %v72 = vunpack.c.l.b16 %v34
  %v73 = vunpack.c.l.b16 %v35
  %v74 = vunpack.c.l.b16 %v36
  %v75 = vpack.c.b16 %v60, %v59
  %v76 = vpack.c.b16 %v62, %v61
  %v77 = vpack.c.b16 %v64, %v63
  %v78 = vpack.c.b16 %v66, %v65
  %v79 = vpack.c.b16 %v68, %v67
  %v80 = vpack.c.b16 %v70, %v69
  %v81 = vpack.c.b16 %v72, %v71
  %v82 = vpack.c.b16 %v74, %v73
  %91 = vmatprep.subr.bf16.mxu0 0
  %92 = vmatpush1.bf16.msra.mxu0 %v75
  %93 = vmatprep.subr.bf16.mxu0 0
  %94 = vmatpush1.bf16.msra.mxu0 %v76
  %95 = vmatprep.subr.bf16.mxu0 0
  %96 = vmatpush1.bf16.msra.mxu0 %v77
  %97 = vmatprep.subr.bf16.mxu0 0
  %98 = vmatpush1.bf16.msra.mxu0 %v78
  %99 = vmatprep.subr.bf16.mxu0 0
  %100 = vmatpush1.bf16.msra.mxu0 %v79
  %101 = vmatprep.subr.bf16.mxu0 0
  %102 = vmatpush1.bf16.msra.mxu0 %v80
  %103 = vmatprep.subr.bf16.mxu0 0
  %104 = vmatpush1.bf16.msra.mxu0 %v81
  %105 = vmatprep.subr.bf16.mxu0 0
  %106 = vmatpush1.bf16.msra.mxu0 %v82
  %107 = vmatprep.subr.bf16.mxu0 0
  %108 = vmatpush1.bf16.msra.mxu0 0
  %109 = vmatprep.subr.bf16.mxu0 0
  %110 = vmatpush1.bf16.msra.mxu0 0
  %111 = vmatprep.subr.bf16.mxu0 0
  %112 = vmatpush1.bf16.msra.mxu0 0
  %113 = vmatprep.subr.bf16.mxu0 0
  %114 = vmatpush1.bf16.msra.mxu0 0
  %115 = vmatprep.subr.bf16.mxu0 0
  %116 = vmatpush1.bf16.msra.mxu0 0
  %117 = vmatprep.subr.bf16.mxu0 0
  %118 = vmatpush1.bf16.msra.mxu0 0
  %119 = vmatprep.subr.bf16.mxu0 0
  %120 = vmatpush1.bf16.msra.mxu0 0
  %121 = vmatprep.subr.bf16.mxu0 0
  %122 = vmatpush1.bf16.msra.mxu0 0
  %123 = vmatprep.mubr.bf16.mxu0 0
  %124 = vmatmul.mubr.bf16.gmra.mrb[0].mxu0 %v20
  %v125 = vpop.f32.mrb[0].mxu0
  %v126 = vadd.f32 %v41, %v125
  %v127 = vpop.f32.mrb[0].mxu0
  %v128 = vpop.f32.mrb[0].mxu0
  %v129 = vpop.f32.mrb[0].mxu0
  %130 = vdwg.mxu0
  %131 = vst [vmem:[%s3] sm:$0xff] %v126
  // Predicated region
  $region14: #{forward.3} parent=0 // pred_check
    _
  $region15: #{forward.3} parent=0 // pred_check_branch
    %133 = sbr.rel (0) target = $region17
  $region16: #{forward.3} parent=0 // pred_region
    _
  $region17: #{forward.3} parent=0 // pred_fallthru
    _
  // Predicated region
  $region18: #{forward.3} parent=0 // pred_check
    _
  $region19: #{forward.3} parent=0 // pred_check_branch
    %135 = sbr.rel (0) target = $region21
  $region20: #{forward.3} parent=0 // pred_region
    _
  $region21: #{forward.3} parent=0 // pred_fallthru
    _

// kernel: forward.2
$region0: #{forward.2}
  #allocation0 [shape = 'u32[]', space=smem, size = 0x4, offset = 0x4, fixed_abs, tag = 'smem constant byte address 0x4 - core index']
  #allocation1 [shape = 'u32[144,128]{1,0:T(1,128)}', space=vmem, size = 0x12000, scoped, tag = 'internal scratch']
  %s0 = inlined_call_operand.vmem [shape: f32[8,128], index: 0, kind: input, shape index: {}]
  %s1 = inlined_call_operand.vmem [shape: f32[8,128], index: 1, kind: input, shape index: {}]
  %s2 = inlined_call_operand.vmem [shape: f32[8,128], index: 2, kind: input, shape index: {}]
  %s3 = inlined_call_operand.vmem [shape: bf16[128,512], index: 3, kind: input, shape index: {}]
  %s4 = inlined_call_operand.vmem [shape: bf16[128,512], index: 4, kind: input, shape index: {}]
  %s5 = inlined_call_operand.vmem [shape: f32[1,512], index: 5, kind: input, shape index: {}]
  %s6 = inlined_call_operand.vmem [shape: f32[8,128], index: 6, kind: output, shape index: {0}]
  %s7 = inlined_call_operand.vmem [shape: f32[8,128], index: 7, kind: output, shape index: {1}]
  %s8 = inlined_call_operand.vmem [shape: bf16[8,128], index: 8, kind: output, shape index: {2}]
  %9 = xla_tuple %s6, %s7, %s8
  %s10 = sld [smem:[#allocation0]]
  $region50: #{forward.2} parent=0
    _
  %s12 = ssub.s32 1, %s10
  %s13 = scalar_select 0, %s12, %s10
  // Predicated region
  $region2: #{forward.2} parent=0 // pred_check
    _
  $region3: #{forward.2} parent=0 // pred_check_branch
    %15 = sbr.rel (0) target = $region5
  $region4: #{forward.2} parent=0 // pred_region
    _
  $region5: #{forward.2} parent=0 // pred_fallthru
    _
  // Predicated region
  $region6: #{forward.2} parent=0 // pred_check
    _
  $region7: #{forward.2} parent=0 // pred_check_branch
    %17 = sbr.rel (0) target = $region9
  $region8: #{forward.2} parent=0 // pred_region
    _
  $region9: #{forward.2} parent=0 // pred_fallthru
    _
  // Predicated region
  $region10: #{forward.2} parent=0 // pred_check
    _
  $region11: #{forward.2} parent=0 // pred_check_branch
    %19 = sbr.rel (0) target = $region13
  $region12: #{forward.2} parent=0 // pred_region
    _
  $region13: #{forward.2} parent=0 // pred_fallthru
    _
  // Predicated region
  $region14: #{forward.2} parent=0 // pred_check
    _
  $region15: #{forward.2} parent=0 // pred_check_branch
    %21 = sbr.rel (0) target = $region17
  $region16: #{forward.2} parent=0 // pred_region
    _
  $region17: #{forward.2} parent=0 // pred_fallthru
    _
  // Predicated region
  $region18: #{forward.2} parent=0 // pred_check
    _
  $region19: #{forward.2} parent=0 // pred_check_branch
    %23 = sbr.rel (0) target = $region21
  $region20: #{forward.2} parent=0 // pred_region
    _
  $region21: #{forward.2} parent=0 // pred_fallthru
    _
  // Predicated region
  $region22: #{forward.2} parent=0 // pred_check
    _
  $region23: #{forward.2} parent=0 // pred_check_branch
    %25 = sbr.rel (0) target = $region25
  $region24: #{forward.2} parent=0 // pred_region
    _
  $region25: #{forward.2} parent=0 // pred_fallthru
    _
  %v27 = vld [vmem:[%s0] sm:$0xff]
  %v28 = vpack.c.bf16 %v27, %v27
  %v29 = vld [vmem:[%s1] sm:$0xff]
  %v30 = vpack.c.bf16 %v29, %v29
  %v31 = vld [vmem:[%s3] sm:$0xff]
  %v32 = vld [vmem:[%s3 + $0x8] sm:$0xff]
  %v33 = vld [vmem:[%s3 + $0x10] sm:$0xff]
  %v34 = vld [vmem:[%s3 + $0x18] sm:$0xff]
  %v35 = vld [vmem:[%s3 + $0x20] sm:$0xff]
  %v36 = vld [vmem:[%s3 + $0x28] sm:$0xff]
  %v37 = vld [vmem:[%s3 + $0x30] sm:$0xff]
  %v38 = vld [vmem:[%s3 + $0x38] sm:$0xff]
  %v39 = vld [vmem:[%s3 + $0x40] sm:$0xff]
  %v40 = vld [vmem:[%s3 + $0x48] sm:$0xff]
  %v41 = vld [vmem:[%s3 + $0x50] sm:$0xff]
  %v42 = vld [vmem:[%s3 + $0x58] sm:$0xff]
  %v43 = vld [vmem:[%s3 + $0x60] sm:$0xff]
  %v44 = vld [vmem:[%s3 + $0x68] sm:$0xff]
  %v45 = vld [vmem:[%s3 + $0x70] sm:$0xff]
  %v46 = vld [vmem:[%s3 + $0x78] sm:$0xff]
  %v47 = vld [vmem:[%s3 + $0x80] sm:$0xff]
  %v48 = vld [vmem:[%s3 + $0x88] sm:$0xff]
  %v49 = vld [vmem:[%s3 + $0x90] sm:$0xff]
  %v50 = vld [vmem:[%s3 + $0x98] sm:$0xff]
  %v51 = vld [vmem:[%s3 + $0xa0] sm:$0xff]
  %v52 = vld [vmem:[%s3 + $0xa8] sm:$0xff]
  %v53 = vld [vmem:[%s3 + $0xb0] sm:$0xff]
  %v54 = vld [vmem:[%s3 + $0xb8] sm:$0xff]
  %v55 = vld [vmem:[%s3 + $0xc0] sm:$0xff]
  %v56 = vld [vmem:[%s3 + $0xc8] sm:$0xff]
  %v57 = vld [vmem:[%s3 + $0xd0] sm:$0xff]
  %v58 = vld [vmem:[%s3 + $0xd8] sm:$0xff]
  %v59 = vld [vmem:[%s3 + $0xe0] sm:$0xff]
  %v60 = vld [vmem:[%s3 + $0xe8] sm:$0xff]
  %v61 = vld [vmem:[%s3 + $0xf0] sm:$0xff]
  %v62 = vld [vmem:[%s3 + $0xf8] sm:$0xff]
  %v63 = vld [vmem:[%s4] sm:$0xff]
  %v64 = vld [vmem:[%s4 + $0x8] sm:$0xff]
  %v65 = vld [vmem:[%s4 + $0x10] sm:$0xff]
  %v66 = vld [vmem:[%s4 + $0x18] sm:$0xff]
  %v67 = vld [vmem:[%s4 + $0x20] sm:$0xff]
  %v68 = vld [vmem:[%s4 + $0x28] sm:$0xff]
  %v69 = vld [vmem:[%s4 + $0x30] sm:$0xff]
  %v70 = vld [vmem:[%s4 + $0x38] sm:$0xff]
  %v71 = vld [vmem:[%s4 + $0x40] sm:$0xff]
  %v72 = vld [vmem:[%s4 + $0x48] sm:$0xff]
  %v73 = vld [vmem:[%s4 + $0x50] sm:$0xff]
  %v74 = vld [vmem:[%s4 + $0x58] sm:$0xff]
  %v75 = vld [vmem:[%s4 + $0x60] sm:$0xff]
  %v76 = vld [vmem:[%s4 + $0x68] sm:$0xff]
  %v77 = vld [vmem:[%s4 + $0x70] sm:$0xff]
  %v78 = vld [vmem:[%s4 + $0x78] sm:$0xff]
  %v79 = vld [vmem:[%s4 + $0x80] sm:$0xff]
  %v80 = vld [vmem:[%s4 + $0x88] sm:$0xff]
  %v81 = vld [vmem:[%s4 + $0x90] sm:$0xff]
  %v82 = vld [vmem:[%s4 + $0x98] sm:$0xff]
  %v83 = vld [vmem:[%s4 + $0xa0] sm:$0xff]
  %v84 = vld [vmem:[%s4 + $0xa8] sm:$0xff]
  %v85 = vld [vmem:[%s4 + $0xb0] sm:$0xff]
  %v86 = vld [vmem:[%s4 + $0xb8] sm:$0xff]
  %v87 = vld [vmem:[%s4 + $0xc0] sm:$0xff]
  %v88 = vld [vmem:[%s4 + $0xc8] sm:$0xff]
  %v89 = vld [vmem:[%s4 + $0xd0] sm:$0xff]
  %v90 = vld [vmem:[%s4 + $0xd8] sm:$0xff]
  %v91 = vld [vmem:[%s4 + $0xe0] sm:$0xff]
  %v92 = vld [vmem:[%s4 + $0xe8] sm:$0xff]
  %v93 = vld [vmem:[%s4 + $0xf0] sm:$0xff]
  %v94 = vld [vmem:[%s4 + $0xf8] sm:$0xff]
  %v127 = vunpack.c.l.b16 %v63
  %v128 = vunpack.c.h.b16 %v63
  %v129 = vunpack.c.l.b16 %v64
  %v130 = vunpack.c.h.b16 %v64
  %v131 = vunpack.c.l.b16 %v65
  %v132 = vunpack.c.h.b16 %v65
  %v133 = vunpack.c.l.b16 %v66
  %v134 = vunpack.c.h.b16 %v66
  %v135 = vunpack.c.l.b16 %v67
  %v136 = vunpack.c.h.b16 %v67
  %v137 = vunpack.c.l.b16 %v68
  %v138 = vunpack.c.h.b16 %v68
  %v139 = vunpack.c.l.b16 %v69
  %v140 = vunpack.c.h.b16 %v69
  %v141 = vunpack.c.l.b16 %v70
  %v142 = vunpack.c.h.b16 %v70
  %v143 = vunpack.c.l.b16 %v71
  %v144 = vunpack.c.h.b16 %v71
  %v145 = vunpack.c.l.b16 %v72
  %v146 = vunpack.c.h.b16 %v72
  %v147 = vunpack.c.l.b16 %v73
  %v148 = vunpack.c.h.b16 %v73
  %v149 = vunpack.c.l.b16 %v74
  %v150 = vunpack.c.h.b16 %v74
  %v151 = vunpack.c.l.b16 %v75
  %v152 = vunpack.c.h.b16 %v75
  %v153 = vunpack.c.l.b16 %v76
  %v154 = vunpack.c.h.b16 %v76
  %v155 = vunpack.c.l.b16 %v77
  %v156 = vunpack.c.h.b16 %v77
  %v157 = vunpack.c.l.b16 %v78
  %v158 = vunpack.c.h.b16 %v78
  %v159 = vunpack.c.l.b16 %v79
  %v160 = vunpack.c.h.b16 %v79
  %v161 = vunpack.c.l.b16 %v80
  %v162 = vunpack.c.h.b16 %v80
  %v163 = vunpack.c.l.b16 %v81
  %v164 = vunpack.c.h.b16 %v81
  %v165 = vunpack.c.l.b16 %v82
  %v166 = vunpack.c.h.b16 %v82
  %v167 = vunpack.c.l.b16 %v83
  %v168 = vunpack.c.h.b16 %v83
  %v169 = vunpack.c.l.b16 %v84
  %v170 = vunpack.c.h.b16 %v84
  %v171 = vunpack.c.l.b16 %v85
  %v172 = vunpack.c.h.b16 %v85
  %v173 = vunpack.c.l.b16 %v86
  %v174 = vunpack.c.h.b16 %v86
  %v175 = vunpack.c.l.b16 %v87
  %v176 = vunpack.c.h.b16 %v87
  %v177 = vunpack.c.l.b16 %v88
  %v178 = vunpack.c.h.b16 %v88
  %v179 = vunpack.c.l.b16 %v89
  %v180 = vunpack.c.h.b16 %v89
  %v181 = vunpack.c.l.b16 %v90
  %v182 = vunpack.c.h.b16 %v90
  %v183 = vunpack.c.l.b16 %v91
  %v184 = vunpack.c.h.b16 %v91
  %v185 = vunpack.c.l.b16 %v92
  %v186 = vunpack.c.h.b16 %v92
  %v187 = vunpack.c.l.b16 %v93
  %v188 = vunpack.c.h.b16 %v93
  %v189 = vunpack.c.l.b16 %v94
  %v190 = vunpack.c.h.b16 %v94
  %v191 = vpack.c.b16 %v131, %v127
  %v192 = vpack.c.b16 %v132, %v128
  %v193 = vpack.c.b16 %v133, %v129
  %v194 = vpack.c.b16 %v134, %v130
  %v195 = vpack.c.b16 %v139, %v135
  %v196 = vpack.c.b16 %v140, %v136
  %v197 = vpack.c.b16 %v141, %v137
  %v198 = vpack.c.b16 %v142, %v138
  %v199 = vpack.c.b16 %v147, %v143
  %v200 = vpack.c.b16 %v148, %v144
  %v201 = vpack.c.b16 %v149, %v145
  %v202 = vpack.c.b16 %v150, %v146
  %v203 = vpack.c.b16 %v155, %v151
  %v204 = vpack.c.b16 %v156, %v152
  %v205 = vpack.c.b16 %v157, %v153
  %v206 = vpack.c.b16 %v158, %v154
  %v207 = vpack.c.b16 %v163, %v159
  %v208 = vpack.c.b16 %v164, %v160
  %v209 = vpack.c.b16 %v165, %v161
  %v210 = vpack.c.b16 %v166, %v162
  %v211 = vpack.c.b16 %v171, %v167
  %v212 = vpack.c.b16 %v172, %v168
  %v213 = vpack.c.b16 %v173, %v169
  %v214 = vpack.c.b16 %v174, %v170
  %v215 = vpack.c.b16 %v179, %v175
  %v216 = vpack.c.b16 %v180, %v176
  %v217 = vpack.c.b16 %v181, %v177
  %v218 = vpack.c.b16 %v182, %v178
  %v219 = vpack.c.b16 %v187, %v183
  %v220 = vpack.c.b16 %v188, %v184
  %v221 = vpack.c.b16 %v189, %v185
  %v222 = vpack.c.b16 %v190, %v186
  %255 = vmatprep.subr.bf16.mxu0 %v192
  %256 = vmatpush1.bf16.msra.mxu0 %v191
  %257 = vmatprep.subr.bf16.mxu0 %v196
  %258 = vmatpush1.bf16.msra.mxu0 %v195
  %259 = vmatprep.subr.bf16.mxu0 %v200
  %260 = vmatpush1.bf16.msra.mxu0 %v199
  %261 = vmatprep.subr.bf16.mxu0 %v204
  %262 = vmatpush1.bf16.msra.mxu0 %v203
  %263 = vmatprep.subr.bf16.mxu0 %v208
  %264 = vmatpush1.bf16.msra.mxu0 %v207
  %265 = vmatprep.subr.bf16.mxu0 %v212
  %266 = vmatpush1.bf16.msra.mxu0 %v211
  %267 = vmatprep.subr.bf16.mxu0 %v216
  %268 = vmatpush1.bf16.msra.mxu0 %v215
  %269 = vmatprep.subr.bf16.mxu0 %v220
  %270 = vmatpush1.bf16.msra.mxu0 %v219
  %271 = vmatprep.subr.bf16.mxu0 0
  %272 = vmatpush1.bf16.msra.mxu0 0
  %273 = vmatprep.subr.bf16.mxu0 0
  %274 = vmatpush1.bf16.msra.mxu0 0
  %275 = vmatprep.subr.bf16.mxu0 0
  %276 = vmatpush1.bf16.msra.mxu0 0
  %277 = vmatprep.subr.bf16.mxu0 0
  %278 = vmatpush1.bf16.msra.mxu0 0
  %279 = vmatprep.subr.bf16.mxu0 0
  %280 = vmatpush1.bf16.msra.mxu0 0
  %281 = vmatprep.subr.bf16.mxu0 0
  %282 = vmatpush1.bf16.msra.mxu0 0
  %283 = vmatprep.subr.bf16.mxu0 0
  %284 = vmatpush1.bf16.msra.mxu0 0
  %285 = vmatprep.subr.bf16.mxu0 0
  %286 = vmatpush1.bf16.msra.mxu0 0
  %287 = vmatprep.mubr.bf16.mxu0 0
  %288 = vmatmul.mubr.bf16.gmra.mrb[0].mxu0 %v30
  %v289 = vpop.f32.mrb[0].mxu0
  %v290 = vadd.f32 0.0, %v289
  %v291 = vpop.f32.mrb[0].mxu0
  %v292 = vadd.f32 0.0, %v291
  %v293 = vpop.f32.mrb[0].mxu0
  %v294 = vpop.f32.mrb[0].mxu0
  %295 = vdwg.mxu0
  %296 = vmatprep.subr.bf16.mxu0 %v194
  %297 = vmatpush1.bf16.msra.mxu0 %v193
  %298 = vmatprep.subr.bf16.mxu0 %v198
  %299 = vmatpush1.bf16.msra.mxu0 %v197
  %300 = vmatprep.subr.bf16.mxu0 %v202
  %301 = vmatpush1.bf16.msra.mxu0 %v201
  %302 = vmatprep.subr.bf16.mxu0 %v206
  %303 = vmatpush1.bf16.msra.mxu0 %v205
  %304 = vmatprep.subr.bf16.mxu0 %v210
  %305 = vmatpush1.bf16.msra.mxu0 %v209
  %306 = vmatprep.subr.bf16.mxu0 %v214
  %307 = vmatpush1.bf16.msra.mxu0 %v213
  %308 = vmatprep.subr.bf16.mxu0 %v218
  %309 = vmatpush1.bf16.msra.mxu0 %v217
  %310 = vmatprep.subr.bf16.mxu0 %v222
  %311 = vmatpush1.bf16.msra.mxu0 %v221
  %312 = vmatprep.subr.bf16.mxu0 0
  %313 = vmatpush1.bf16.msra.mxu0 0
  %314 = vmatprep.subr.bf16.mxu0 0
  %315 = vmatpush1.bf16.msra.mxu0 0
  %316 = vmatprep.subr.bf16.mxu0 0
  %317 = vmatpush1.bf16.msra.mxu0 0
  %318 = vmatprep.subr.bf16.mxu0 0
  %319 = vmatpush1.bf16.msra.mxu0 0
  %320 = vmatprep.subr.bf16.mxu0 0
  %321 = vmatpush1.bf16.msra.mxu0 0
  %322 = vmatprep.subr.bf16.mxu0 0
  %323 = vmatpush1.bf16.msra.mxu0 0
  %324 = vmatprep.subr.bf16.mxu0 0
  %325 = vmatpush1.bf16.msra.mxu0 0
  %326 = vmatprep.subr.bf16.mxu0 0
  %327 = vmatpush1.bf16.msra.mxu0 0
  %328 = vmatprep.mubr.bf16.mxu0 0
  %329 = vmatmul.mubr.bf16.gmra.mrb[0].mxu0 %v30
  %v330 = vpop.f32.mrb[0].mxu0
  %v331 = vadd.f32 0.0, %v330
  %v332 = vpop.f32.mrb[0].mxu0
  %v333 = vadd.f32 0.0, %v332
  %v334 = vpop.f32.mrb[0].mxu0
  %v335 = vpop.f32.mrb[0].mxu0
  %336 = vdwg.mxu0
  %v369 = vunpack.c.l.b16 %v31
  %v370 = vunpack.c.h.b16 %v31
  %v371 = vunpack.c.l.b16 %v32
  %v372 = vunpack.c.h.b16 %v32
  %v373 = vunpack.c.l.b16 %v33
  %v374 = vunpack.c.h.b16 %v33
  %v375 = vunpack.c.l.b16 %v34
  %v376 = vunpack.c.h.b16 %v34
  %v377 = vunpack.c.l.b16 %v35
  %v378 = vunpack.c.h.b16 %v35
  %v379 = vunpack.c.l.b16 %v36
  %v380 = vunpack.c.h.b16 %v36
  %v381 = vunpack.c.l.b16 %v37
  %v382 = vunpack.c.h.b16 %v37
  %v383 = vunpack.c.l.b16 %v38
  %v384 = vunpack.c.h.b16 %v38
  %v385 = vunpack.c.l.b16 %v39
  %v386 = vunpack.c.h.b16 %v39
  %v387 = vunpack.c.l.b16 %v40
  %v388 = vunpack.c.h.b16 %v40
  %v389 = vunpack.c.l.b16 %v41
  %v390 = vunpack.c.h.b16 %v41
  %v391 = vunpack.c.l.b16 %v42
  %v392 = vunpack.c.h.b16 %v42
  %v393 = vunpack.c.l.b16 %v43
  %v394 = vunpack.c.h.b16 %v43
  %v395 = vunpack.c.l.b16 %v44
  %v396 = vunpack.c.h.b16 %v44
  %v397 = vunpack.c.l.b16 %v45
  %v398 = vunpack.c.h.b16 %v45
  %v399 = vunpack.c.l.b16 %v46
  %v400 = vunpack.c.h.b16 %v46
  %v401 = vunpack.c.l.b16 %v47
  %v402 = vunpack.c.h.b16 %v47
  %v403 = vunpack.c.l.b16 %v48
  %v404 = vunpack.c.h.b16 %v48
  %v405 = vunpack.c.l.b16 %v49
  %v406 = vunpack.c.h.b16 %v49
  %v407 = vunpack.c.l.b16 %v50
  %v408 = vunpack.c.h.b16 %v50
  %v409 = vunpack.c.l.b16 %v51
  %v410 = vunpack.c.h.b16 %v51
  %v411 = vunpack.c.l.b16 %v52
  %v412 = vunpack.c.h.b16 %v52
  %v413 = vunpack.c.l.b16 %v53
  %v414 = vunpack.c.h.b16 %v53
  %v415 = vunpack.c.l.b16 %v54
  %v416 = vunpack.c.h.b16 %v54
  %v417 = vunpack.c.l.b16 %v55
  %v418 = vunpack.c.h.b16 %v55
  %v419 = vunpack.c.l.b16 %v56
  %v420 = vunpack.c.h.b16 %v56
  %v421 = vunpack.c.l.b16 %v57
  %v422 = vunpack.c.h.b16 %v57
  %v423 = vunpack.c.l.b16 %v58
  %v424 = vunpack.c.h.b16 %v58
  %v425 = vunpack.c.l.b16 %v59
  %v426 = vunpack.c.h.b16 %v59
  %v427 = vunpack.c.l.b16 %v60
  %v428 = vunpack.c.h.b16 %v60
  %v429 = vunpack.c.l.b16 %v61
  %v430 = vunpack.c.h.b16 %v61
  %v431 = vunpack.c.l.b16 %v62
  %v432 = vunpack.c.h.b16 %v62
  %v433 = vpack.c.b16 %v373, %v369
  %v434 = vpack.c.b16 %v374, %v370
  %v435 = vpack.c.b16 %v375, %v371
  %v436 = vpack.c.b16 %v376, %v372
  %v437 = vpack.c.b16 %v381, %v377
  %v438 = vpack.c.b16 %v382, %v378
  %v439 = vpack.c.b16 %v383, %v379
  %v440 = vpack.c.b16 %v384, %v380
  %v441 = vpack.c.b16 %v389, %v385
  %v442 = vpack.c.b16 %v390, %v386
  %v443 = vpack.c.b16 %v391, %v387
  %v444 = vpack.c.b16 %v392, %v388
  %v445 = vpack.c.b16 %v397, %v393
  %v446 = vpack.c.b16 %v398, %v394
  %v447 = vpack.c.b16 %v399, %v395
  %v448 = vpack.c.b16 %v400, %v396
  %v449 = vpack.c.b16 %v405, %v401
  %v450 = vpack.c.b16 %v406, %v402
  %v451 = vpack.c.b16 %v407, %v403
  %v452 = vpack.c.b16 %v408, %v404
  %v453 = vpack.c.b16 %v413, %v409
  %v454 = vpack.c.b16 %v414, %v410
  %v455 = vpack.c.b16 %v415, %v411
  %v456 = vpack.c.b16 %v416, %v412
  %v457 = vpack.c.b16 %v421, %v417
  %v458 = vpack.c.b16 %v422, %v418
  %v459 = vpack.c.b16 %v423, %v419
  %v460 = vpack.c.b16 %v424, %v420
  %v461 = vpack.c.b16 %v429, %v425
  %v462 = vpack.c.b16 %v430, %v426
  %v463 = vpack.c.b16 %v431, %v427
  %v464 = vpack.c.b16 %v432, %v428
  %497 = vmatprep.subr.bf16.mxu0 %v434
  %498 = vmatpush1.bf16.msra.mxu0 %v433
  %499 = vmatprep.subr.bf16.mxu0 %v438
  %500 = vmatpush1.bf16.msra.mxu0 %v437
  %501 = vmatprep.subr.bf16.mxu0 %v442
  %502 = vmatpush1.bf16.msra.mxu0 %v441
  %503 = vmatprep.subr.bf16.mxu0 %v446
  %504 = vmatpush1.bf16.msra.mxu0 %v445
  %505 = vmatprep.subr.bf16.mxu0 %v450
  %506 = vmatpush1.bf16.msra.mxu0 %v449
  %507 = vmatprep.subr.bf16.mxu0 %v454
  %508 = vmatpush1.bf16.msra.mxu0 %v453
  %509 = vmatprep.subr.bf16.mxu0 %v458
  %510 = vmatpush1.bf16.msra.mxu0 %v457
  %511 = vmatprep.subr.bf16.mxu0 %v462
  %512 = vmatpush1.bf16.msra.mxu0 %v461
  %513 = vmatprep.subr.bf16.mxu0 0
  %514 = vmatpush1.bf16.msra.mxu0 0
  %515 = vmatprep.subr.bf16.mxu0 0
  %516 = vmatpush1.bf16.msra.mxu0 0
  %517 = vmatprep.subr.bf16.mxu0 0
  %518 = vmatpush1.bf16.msra.mxu0 0
  %519 = vmatprep.subr.bf16.mxu0 0
  %520 = vmatpush1.bf16.msra.mxu0 0
  %521 = vmatprep.subr.bf16.mxu0 0
  %522 = vmatpush1.bf16.msra.mxu0 0
  %523 = vmatprep.subr.bf16.mxu0 0
  %524 = vmatpush1.bf16.msra.mxu0 0
  %525 = vmatprep.subr.bf16.mxu0 0
  %526 = vmatpush1.bf16.msra.mxu0 0
  %527 = vmatprep.subr.bf16.mxu0 0
  %528 = vmatpush1.bf16.msra.mxu0 0
  %529 = vmatprep.mubr.bf16.mxu0 0
  %530 = vmatmul.mubr.bf16.gmra.mrb[0].mxu0 %v28
  %v531 = vpop.f32.mrb[0].mxu0
  %v532 = vadd.f32 %v290, %v531
  %v533 = vpop.f32.mrb[0].mxu0
  %v534 = vadd.f32 %v292, %v533
  %v535 = vpop.f32.mrb[0].mxu0
  %v536 = vpop.f32.mrb[0].mxu0
  %537 = vdwg.mxu0
  %538 = vmatprep.subr.bf16.mxu0 %v436
  %539 = vmatpush1.bf16.msra.mxu0 %v435
  %540 = vmatprep.subr.bf16.mxu0 %v440
  %541 = vmatpush1.bf16.msra.mxu0 %v439
  %542 = vmatprep.subr.bf16.mxu0 %v444
  %543 = vmatpush1.bf16.msra.mxu0 %v443
  %544 = vmatprep.subr.bf16.mxu0 %v448
  %545 = vmatpush1.bf16.msra.mxu0 %v447
  %546 = vmatprep.subr.bf16.mxu0 %v452
  %547 = vmatpush1.bf16.msra.mxu0 %v451
  %548 = vmatprep.subr.bf16.mxu0 %v456
  %549 = vmatpush1.bf16.msra.mxu0 %v455
  %550 = vmatprep.subr.bf16.mxu0 %v460
  %551 = vmatpush1.bf16.msra.mxu0 %v459
  %552 = vmatprep.subr.bf16.mxu0 %v464
  %553 = vmatpush1.bf16.msra.mxu0 %v463
  %554 = vmatprep.subr.bf16.mxu0 0
  %555 = vmatpush1.bf16.msra.mxu0 0
  %556 = vmatprep.subr.bf16.mxu0 0
  %557 = vmatpush1.bf16.msra.mxu0 0
  %558 = vmatprep.subr.bf16.mxu0 0
  %559 = vmatpush1.bf16.msra.mxu0 0
  %560 = vmatprep.subr.bf16.mxu0 0
  %561 = vmatpush1.bf16.msra.mxu0 0
  %562 = vmatprep.subr.bf16.mxu0 0
  %563 = vmatpush1.bf16.msra.mxu0 0
  %564 = vmatprep.subr.bf16.mxu0 0
  %565 = vmatpush1.bf16.msra.mxu0 0
  %566 = vmatprep.subr.bf16.mxu0 0
  %567 = vmatpush1.bf16.msra.mxu0 0
  %568 = vmatprep.subr.bf16.mxu0 0
  %569 = vmatpush1.bf16.msra.mxu0 0
  %570 = vmatprep.mubr.bf16.mxu0 0
  %571 = vmatmul.mubr.bf16.gmra.mrb[0].mxu0 %v28
  %v572 = vpop.f32.mrb[0].mxu0
  %v573 = vadd.f32 %v331, %v572
  %v574 = vpop.f32.mrb[0].mxu0
  %v575 = vadd.f32 %v333, %v574
  %v576 = vpop.f32.mrb[0].mxu0
  %v577 = vpop.f32.mrb[0].mxu0
  %578 = vdwg.mxu0
  %v579 = vld [vmem:[%s5] sm:$0xf]
  %v581 = vlaneseq
  %v582 = vshrl.u32 %v581, 7
  %v583 = vsub.s32 0, %v582
  %v584 = vrot.slane %v579, %v583
  %v585 = vlaneseq
  %v586 = vshrl.u32 %v585, 7
  %v587 = vsub.s32 1, %v586
  %v588 = vrot.slane %v579, %v587
  %v589 = vlaneseq
  %v590 = vshrl.u32 %v589, 7
  %v591 = vsub.s32 2, %v590
  %v592 = vrot.slane %v579, %v591
  %v593 = vlaneseq
  %v594 = vshrl.u32 %v593, 7
  %v595 = vsub.s32 3, %v594
  %v596 = vrot.slane %v579, %v595
  %v601 = vadd.f32 %v532, %v584
  %v602 = vadd.f32 %v534, %v588
  %v603 = vadd.f32 %v573, %v592
  %v604 = vadd.f32 %v575, %v596
  %v605 = vxor.u32 %v601, 2147483648
  %v606 = vmul.f32 %v605, 1.442695
  %v607 = vpow.pop %v606
  %v608 = vadd.f32 %v607, 1.0
  %v609 = vrcp.pop %v608
  %v610 = vmul.f32 1.0, %v609
  %v611 = vxor.u32 %v602, 2147483648
  %v612 = vmul.f32 %v611, 1.442695
  %v613 = vpow.pop %v612
  %v614 = vadd.f32 %v613, 1.0
  %v615 = vrcp.pop %v614
  %v616 = vmul.f32 1.0, %v615
  %v617 = vtanh.pop %v603
  %v618 = vxor.u32 %v604, 2147483648
  %v619 = vmul.f32 %v618, 1.442695
  %v620 = vpow.pop %v619
  %v621 = vadd.f32 %v620, 1.0
  %v622 = vrcp.pop %v621
  %v623 = vmul.f32 1.0, %v622
  %v624 = vld [vmem:[%s2] sm:$0xff]
  %v625 = vmul.f32 %v616, %v624
  %v626 = vmul.f32 %v610, %v617
  %v627 = vadd.f32 %v625, %v626
  %v628 = vtanh.pop %v627
  %v629 = vmul.f32 %v623, %v628
  %630 = vst [vmem:[%s7] sm:$0xff] %v627
  %631 = vst [vmem:[%s6] sm:$0xff] %v629
  %v632 = vmax.f32 %v629, 0.0
  %v633 = vpack.c.bf16 %v632, %v632
  %634 = vst [vmem:[%s8] sm:$0xf] %v633
  // Predicated region
  $region26: #{forward.2} parent=0 // pred_check
    _
  $region27: #{forward.2} parent=0 // pred_check_branch
    %636 = sbr.rel (0) target = $region29
  $region28: #{forward.2} parent=0 // pred_region
    _
  $region29: #{forward.2} parent=0 // pred_fallthru
    _
  // Predicated region
  $region30: #{forward.2} parent=0 // pred_check
    _
  $region31: #{forward.2} parent=0 // pred_check_branch
    %638 = sbr.rel (0) target = $region33
  $region32: #{forward.2} parent=0 // pred_region
    _
  $region33: #{forward.2} parent=0 // pred_fallthru
    _
  // Predicated region
  $region34: #{forward.2} parent=0 // pred_check
    _
  $region35: #{forward.2} parent=0 // pred_check_branch
    %640 = sbr.rel (0) target = $region37
  $region36: #{forward.2} parent=0 // pred_region
    _
  $region37: #{forward.2} parent=0 // pred_fallthru
    _
  // Predicated region
  $region38: #{forward.2} parent=0 // pred_check
    _
  $region39: #{forward.2} parent=0 // pred_check_branch
    %642 = sbr.rel (0) target = $region41
  $region40: #{forward.2} parent=0 // pred_region
    _
  $region41: #{forward.2} parent=0 // pred_fallthru
    _
  // Predicated region
  $region42: #{forward.2} parent=0 // pred_check
    _
  $region43: #{forward.2} parent=0 // pred_check_branch
    %644 = sbr.rel (0) target = $region45
  $region44: #{forward.2} parent=0 // pred_region
    _
  $region45: #{forward.2} parent=0 // pred_fallthru
    _
  // Predicated region
  $region46: #{forward.2} parent=0 // pred_check
    _
  $region47: #{forward.2} parent=0 // pred_check_branch
    %646 = sbr.rel (0) target = $region49
  $region48: #{forward.2} parent=0 // pred_region
    _
  $region49: #{forward.2} parent=0 // pred_fallthru
    _

</llo_original>
